<compile_context>
chip_gen: v5e
topology: v5e:2x2
jax: 0.10.0
libtpu: 0.0.40
codegen_flags: <defaults>
</compile_context>

<pallas_src>
import functools

import jax
import jax.numpy as jnp
from jax.experimental import pallas as pl
from jax.experimental.pallas import tpu as pltpu


def score_kernel(x_ref, w1_ref, b1_ref, w2_ref, b2_ref, w3_ref, b3_ref, o_ref):
    # Cast the activation tile to bf16 in-kernel (saves a full HBM pass over x
    # compared to casting in the wrapper).
    x_b = x_ref[...].astype(jnp.bfloat16)
    # Layer 1: Linear + ReLU   (Dropout == identity at inference)
    h1 = jnp.dot(x_b, w1_ref[...], preferred_element_type=jnp.float32)
    h1 = jnp.maximum(h1 + b1_ref[...], 0.0)          # f32 elementwise (v5e-friendly)
    # Layer 2: Linear + ReLU
    h2 = jnp.dot(h1.astype(jnp.bfloat16), w2_ref[...],
                 preferred_element_type=jnp.float32)
    h2 = jnp.maximum(h2 + b2_ref[...], 0.0)
    # Layer 3: scores for all tm rows of this tile, emitted lane-dense as (1, tm).
    # w3_row (1,H) contracted with h2 (tm,H) over H -> (1, tm): rows land on lanes,
    # so the store is a full-lane unmasked vst and no (tm,1)->(1,tm) relayout occurs.
    scores = jax.lax.dot_general(
        w3_ref[...], h2.astype(jnp.bfloat16),
        dimension_numbers=(((1,), (1,)), ((), ())),
        preferred_element_type=jnp.float32)
    o_ref[...] = (scores + b3_ref[0, 0]).astype(o_ref.dtype)   # b3 scalar from SMEM


def _pick_tm(n, tm_max):
    """Row tile: multiple of 128, <= tm_max, and (when possible) >= 2 grid steps
    so the 'parallel' axis can be sharded across both v7x TensorCores."""
    half = -(-n // 2)                 # ceil(n / 2)
    tm = -(-half // 128) * 128        # round up to a multiple of 128
    return max(128, min(tm_max, tm))


@functools.partial(jax.jit, static_argnames=("tm_max",))
def score_forward(x, w1, b1, w2, b2, w3, b3, *, tm_max=1024):
    N, E = x.shape
    H = w1.shape[1]

    tm = _pick_tm(N, tm_max)
    grid_m = pl.cdiv(N, tm)
    n_pad = grid_m * tm               # output padded up; tail rows sliced off below

    # Weights are tiny (O(H^2)): one-off bf16 casts.  Biases stay f32.
    w1_b = w1.astype(jnp.bfloat16)
    w2_b = w2.astype(jnp.bfloat16)
    w3_b = w3.astype(jnp.bfloat16)

    flops = 2 * n_pad * (E * H + H * H + H)
    bytes_accessed = (
        N * E * 4                      # x (f32, read once)
        + (E * H + H * H + H) * 2      # weights (bf16, resident)
        + (2 * H + 1) * 4              # biases (f32)
        + n_pad * 4                    # output scores (f32)
    )

    const = pl.Buffered(1)             # single-buffer blocks whose index never changes

    out_row = pl.pallas_call(
        score_kernel,
        out_shape=jax.ShapeDtypeStruct((1, n_pad), jnp.float32),
        grid_spec=pltpu.PrefetchScalarGridSpec(
            num_scalar_prefetch=0,
            grid=(grid_m,),
            in_specs=[
                pl.BlockSpec((tm, E), lambda i: (i, 0)),                       # x rows (f32)
                pl.BlockSpec((E, H), lambda i: (0, 0), pipeline_mode=const),   # W1 (bf16)
                pl.BlockSpec((1, H), lambda i: (0, 0), pipeline_mode=const),   # b1 (f32)
                pl.BlockSpec((H, H), lambda i: (0, 0), pipeline_mode=const),   # W2 (bf16)
                pl.BlockSpec((1, H), lambda i: (0, 0), pipeline_mode=const),   # b2 (f32)
                pl.BlockSpec((1, H), lambda i: (0, 0), pipeline_mode=const),   # W3 row (bf16)
                pl.BlockSpec(memory_space=pltpu.MemorySpace.SMEM),             # b3 scalar
            ],
            out_specs=pl.BlockSpec((1, tm), lambda i: (0, i)),  # lane-dense score slab
        ),
        compiler_params=pltpu.CompilerParams(
            dimension_semantics=("parallel",),
            vmem_limit_bytes=32 * 1024 * 1024,
        ),
        cost_estimate=pl.CostEstimate(
            flops=flops, transcendentals=0, bytes_accessed=bytes_accessed),
    )(x, w1_b, b1, w2_b, b2, w3_b, b3)

    # (1, n_pad) lane-dense slab -> (N, 1) scores, dropping the padded tail rows
    # (they contain garbage from the overhanging last input tile; never reduced).
    return out_row.reshape(n_pad, 1)[:N]


def init_params(key, embeds_dim, hidden_dim):
    """Deterministic synthetic params matching nn.Linear shapes.

    W1, W2 stored transposed (E,H)/(H,H); W3 kept in torch layout (1,H).
    """
    k1, k2, k3, k4, k5, k6 = jax.random.split(key, 6)
    s1 = 1.0 / jnp.sqrt(embeds_dim)
    s2 = 1.0 / jnp.sqrt(hidden_dim)
    w1 = jax.random.uniform(k1, (embeds_dim, hidden_dim), jnp.float32, -s1, s1)
    b1 = jax.random.uniform(k2, (1, hidden_dim), jnp.float32, -s1, s1)
    w2 = jax.random.uniform(k3, (hidden_dim, hidden_dim), jnp.float32, -s2, s2)
    b2 = jax.random.uniform(k4, (1, hidden_dim), jnp.float32, -s2, s2)
    w3 = jax.random.uniform(k5, (1, hidden_dim), jnp.float32, -s2, s2)
    b3 = jax.random.uniform(k6, (1, 1), jnp.float32, -s2, s2)
    return w1, b1, w2, b2, w3, b3


def reference_forward(x, w1, b1, w2, b2, w3, b3):
    h1 = jnp.maximum(x @ w1 + b1, 0.0)
    h2 = jnp.maximum(h1 @ w2 + b2, 0.0)
    return h2 @ w3.T + b3


if __name__ == "__main__":
    N = 512           # batch of candidate spans/pairs to score (2 grid steps at tm=256)
    EMBEDS_DIM = 32   # input embedding size
    HIDDEN_DIM = 32   # args.hidden_dim

    key = jax.random.PRNGKey(0)
    kx, kp = jax.random.split(key)
    x = jax.random.normal(kx, (N, EMBEDS_DIM), jnp.float32)
    params = init_params(kp, EMBEDS_DIM, HIDDEN_DIM)

    out = score_forward(x, *params)
    out = jax.block_until_ready(out)

    ref = reference_forward(x, *params)
    assert out.shape == (N, 1), f"bad output shape {out.shape}"
    # bf16 matmul operands with f32 accumulation -> loosened tolerance vs f32 reference.
    assert jnp.allclose(out, ref, atol=5e-2, rtol=5e-2), (
        "mismatch vs reference; max abs err = "
        f"{float(jnp.max(jnp.abs(out - ref)))}")

    print("KERNEL_OK")
</pallas_src>

<mosaic_0001>
module attributes {stable_mosaic.version = 11 : i64} {
  func.func @score_kernel(%arg0: i32, %arg1: memref<256x32xf32, #tpu.memory_space<vmem>>, %arg2: memref<32x32xbf16, #tpu.memory_space<vmem>>, %arg3: memref<1x32xf32, #tpu.memory_space<vmem>>, %arg4: memref<32x32xbf16, #tpu.memory_space<vmem>>, %arg5: memref<1x32xf32, #tpu.memory_space<vmem>>, %arg6: memref<1x32xbf16, #tpu.memory_space<vmem>>, %arg7: memref<1x1xf32, #tpu.memory_space<smem>>, %arg8: memref<1x256xf32, #tpu.memory_space<vmem>>) attributes {dimension_semantics = [#tpu.dimension_semantics<parallel>], iteration_bounds = array<i64: 2>, scalar_prefetch = 0 : i64, scratch_operands = 0 : i64, tpu.core_type = #tpu.core_type<tc>, window_params = [{transform_indices = @transform_0, window_bounds = array<i64: 256, 32>}, {pipeline_mode = #tpu.pipeline_mode<synchronous>, transform_indices = @transform_1, window_bounds = array<i64: 32, 32>}, {pipeline_mode = #tpu.pipeline_mode<synchronous>, transform_indices = @transform_2, window_bounds = array<i64: 1, 32>}, {pipeline_mode = #tpu.pipeline_mode<synchronous>, transform_indices = @transform_3, window_bounds = array<i64: 32, 32>}, {pipeline_mode = #tpu.pipeline_mode<synchronous>, transform_indices = @transform_4, window_bounds = array<i64: 1, 32>}, {pipeline_mode = #tpu.pipeline_mode<synchronous>, transform_indices = @transform_5, window_bounds = array<i64: 1, 32>}, {transform_indices = @transform_6, window_bounds = array<i64: 1, 1>}, {transform_indices = @transform_7, window_bounds = array<i64: 1, 256>}]} {
    %c0 = arith.constant 0 : index
    %c0_0 = arith.constant 0 : index
    %0 = vector.load %arg1[%c0, %c0_0] : memref<256x32xf32, #tpu.memory_space<vmem>>, vector<256x32xf32>
    %1 = arith.truncf %0 : vector<256x32xf32> to vector<256x32xbf16>
    %c0_1 = arith.constant 0 : index
    %c0_2 = arith.constant 0 : index
    %2 = vector.load %arg2[%c0_1, %c0_2] : memref<32x32xbf16, #tpu.memory_space<vmem>>, vector<32x32xbf16>
    %cst = arith.constant dense<0.000000e+00> : vector<256x32xf32>
    %3 = tpu.matmul %1, %2, %cst {dimension_numbers = #tpu.dot_dimension_numbers<[1], [0], [0], [1], [0, 0, 1, 1], [], []>} : vector<256x32xbf16>, vector<32x32xbf16>, vector<256x32xf32> -> vector<256x32xf32>
    %c0_3 = arith.constant 0 : index
    %c0_4 = arith.constant 0 : index
    %4 = vector.load %arg3[%c0_3, %c0_4] : memref<1x32xf32, #tpu.memory_space<vmem>>, vector<1x32xf32>
    %5 = vector.broadcast %4 : vector<1x32xf32> to vector<256x32xf32>
    %6 = arith.addf %3, %5 : vector<256x32xf32>
    %cst_5 = arith.constant 0.000000e+00 : f32
    %7 = vector.broadcast %cst_5 : f32 to vector<256x32xf32>
    %8 = arith.maximumf %6, %7 : vector<256x32xf32>
    %9 = arith.truncf %8 : vector<256x32xf32> to vector<256x32xbf16>
    %c0_6 = arith.constant 0 : index
    %c0_7 = arith.constant 0 : index
    %10 = vector.load %arg4[%c0_6, %c0_7] : memref<32x32xbf16, #tpu.memory_space<vmem>>, vector<32x32xbf16>
    %cst_8 = arith.constant dense<0.000000e+00> : vector<256x32xf32>
    %11 = tpu.matmul %9, %10, %cst_8 {dimension_numbers = #tpu.dot_dimension_numbers<[1], [0], [0], [1], [0, 0, 1, 1], [], []>} : vector<256x32xbf16>, vector<32x32xbf16>, vector<256x32xf32> -> vector<256x32xf32>
    %c0_9 = arith.constant 0 : index
    %c0_10 = arith.constant 0 : index
    %12 = vector.load %arg5[%c0_9, %c0_10] : memref<1x32xf32, #tpu.memory_space<vmem>>, vector<1x32xf32>
    %13 = vector.broadcast %12 : vector<1x32xf32> to vector<256x32xf32>
    %14 = arith.addf %11, %13 : vector<256x32xf32>
    %cst_11 = arith.constant 0.000000e+00 : f32
    %15 = vector.broadcast %cst_11 : f32 to vector<256x32xf32>
    %16 = arith.maximumf %14, %15 : vector<256x32xf32>
    %c0_12 = arith.constant 0 : index
    %c0_13 = arith.constant 0 : index
    %17 = vector.load %arg6[%c0_12, %c0_13] : memref<1x32xbf16, #tpu.memory_space<vmem>>, vector<1x32xbf16>
    %18 = arith.truncf %16 : vector<256x32xf32> to vector<256x32xbf16>
    %cst_14 = arith.constant dense<0.000000e+00> : vector<1x256xf32>
    %19 = tpu.matmul %17, %18, %cst_14 {dimension_numbers = #tpu.dot_dimension_numbers<[1], [1], [0], [0], [0, 0, 1, 0], [], []>} : vector<1x32xbf16>, vector<256x32xbf16>, vector<1x256xf32> -> vector<1x256xf32>
    %c0_15 = arith.constant 0 : index
    %c0_16 = arith.constant 0 : index
    %20 = memref.load %arg7[%c0_15, %c0_16] : memref<1x1xf32, #tpu.memory_space<smem>>
    %21 = vector.broadcast %20 : f32 to vector<1x256xf32>
    %22 = arith.addf %19, %21 : vector<1x256xf32>
    %c0_17 = arith.constant 0 : index
    %c0_18 = arith.constant 0 : index
    %23 = vector.load %arg8[%c0_17, %c0_18] : memref<1x256xf32, #tpu.memory_space<vmem>>, vector<1x256xf32>
    tpu.vector_store %arg8[%c0_17, %c0_18], %22 {strides = array<i32>} : memref<1x256xf32, #tpu.memory_space<vmem>>, vector<1x256xf32>,
    return
  }
  func.func @transform_0(%arg0: i32) -> (i32, i32) {
    %c0_i32 = arith.constant 0 : i32
    %c0_i32_0 = arith.constant 0 : i32
    return %arg0, %c0_i32 : i32, i32
  }
  func.func @transform_1(%arg0: i32) -> (i32, i32) {
    %c0_i32 = arith.constant 0 : i32
    %c0_i32_0 = arith.constant 0 : i32
    %c0_i32_1 = arith.constant 0 : i32
    return %c0_i32, %c0_i32_0 : i32, i32
  }
  func.func @transform_2(%arg0: i32) -> (i32, i32) {
    %c0_i32 = arith.constant 0 : i32
    %c0_i32_0 = arith.constant 0 : i32
    %c0_i32_1 = arith.constant 0 : i32
    return %c0_i32, %c0_i32_0 : i32, i32
  }
  func.func @transform_3(%arg0: i32) -> (i32, i32) {
    %c0_i32 = arith.constant 0 : i32
    %c0_i32_0 = arith.constant 0 : i32
    %c0_i32_1 = arith.constant 0 : i32
    return %c0_i32, %c0_i32_0 : i32, i32
  }
  func.func @transform_4(%arg0: i32) -> (i32, i32) {
    %c0_i32 = arith.constant 0 : i32
    %c0_i32_0 = arith.constant 0 : i32
    %c0_i32_1 = arith.constant 0 : i32
    return %c0_i32, %c0_i32_0 : i32, i32
  }
  func.func @transform_5(%arg0: i32) -> (i32, i32) {
    %c0_i32 = arith.constant 0 : i32
    %c0_i32_0 = arith.constant 0 : i32
    %c0_i32_1 = arith.constant 0 : i32
    return %c0_i32, %c0_i32_0 : i32, i32
  }
  func.func @transform_6(%arg0: i32) -> (i32, i32) {
    %c0_i32 = arith.constant 0 : i32
    %c0_i32_0 = arith.constant 0 : i32
    %c0_i32_1 = arith.constant 0 : i32
    return %c0_i32, %c0_i32_0 : i32, i32
  }
  func.func @transform_7(%arg0: i32) -> (i32, i32) {
    %c0_i32 = arith.constant 0 : i32
    %c0_i32_0 = arith.constant 0 : i32
    return %c0_i32, %arg0 : i32, i32
  }
}

</mosaic_0001>

<llo_original>
// kernel: score_forward.1
$region0: #{score_forward.1}
  #allocation0 [shape = 'u32[]', space=smem, size = 0x4, offset = 0x4, fixed_abs, tag = 'smem constant byte address 0x4 - core index']
  #allocation1 [shape = 'u32[72,128]{1,0:T(1,128)}', space=vmem, size = 0x9000, scoped, tag = 'internal scratch']
  #allocation2 [shape = 'f32[1,1]{1,0:T(1,128)S(6)}', space=smem, size = 0x200, scoped, tag = 'scoped memory for score_forward.1']
  %s0 = inlined_call_operand.vmem [shape: f32[512,32], index: 0, kind: input, shape index: {}]
  %s1 = inlined_call_operand.vmem [shape: bf16[32,32], index: 1, kind: input, shape index: {}]
  %s2 = inlined_call_operand.vmem [shape: f32[1,32], index: 2, kind: input, shape index: {}]
  %s3 = inlined_call_operand.vmem [shape: bf16[32,32], index: 3, kind: input, shape index: {}]
  %s4 = inlined_call_operand.vmem [shape: f32[1,32], index: 4, kind: input, shape index: {}]
  %s5 = inlined_call_operand.vmem [shape: bf16[1,32], index: 5, kind: input, shape index: {}]
  %s6 = inlined_call_operand.<no memory space> [shape: f32[1,1], index: 6, kind: input, shape index: {}]
  %s7 = inlined_call_operand.hbm [shape: f32[1,512], index: 7, kind: output, shape index: {}]
  %s8 = sld [smem:[#allocation0]]
  $region61: #{score_forward.1} parent=0
    _
  %s10 = ssub.s32 1, %s8
  %s11 = scalar_select 0, %s10, %s8
  %12 = sst [smem:[#allocation2]] %s6
  $region1: #{score_forward.1} parent=0
    #allocation3 [shape = 'u8[2048]{0}', space=vmem, size = 0x800, scoped, tag = 'output window, operand 0']
    #allocation4 [shape = 's32[2]{0}', space=sflag, size = 0x8, scoped, tag = 'scoped memory for score_forward.1']
    %13 = vsyncpa [#allocation4], 0
    %s14 = scalar_lea.sflag [#allocation4], 1
    %15 = vsyncpa %s14, 0
    loop: start=0, step=1, limit=4
    $region2: #{score_forward.1} parent=1 // loop_pre_header
      _
    $region3: #{score_forward.1} parent=1 // loop_header
      %s17 = sphi 0, %s21
      %p18 = scmp.ge.s32.totalorder %s17, 4
      %s27 = sphi 0, %s29
      %s30 = sphi 0, %s27
      %s31 = sphi 0, %s30
      %s47 = sphi 0, %s31
      %s51 = sphi 0, %s51
      %s53 = sphi 0, %s51
      %s54 = sphi 0, %s53
      %s68 = sphi 0, %s54
      %s72 = sphi 0, %s72
      %s74 = sphi 0, %s72
      %s75 = sphi 0, %s74
      %s89 = sphi 0, %s75
      %s93 = sphi 0, %s93
      %s95 = sphi 0, %s93
      %s96 = sphi 0, %s95
      %s110 = sphi 0, %s96
      %s114 = sphi 0, %s114
      %s116 = sphi 0, %s114
      %s117 = sphi 0, %s116
      %s131 = sphi 0, %s117
      %s135 = sphi 0, %s135
      %s137 = sphi 0, %s135
      %s138 = sphi 0, %s137
      %s152 = sphi 0, %s138
      %s156 = sphi 0, %s156
      %s158 = sphi 0, %s156
      %s159 = sphi 0, %s158
      %s173 = sphi 0, %s159
      %s179 = sphi 0, %s181
      %s182 = sphi 0, %s179
      %s183 = sphi 0, %s182
      %s199 = sphi 0, %s183
    $region4: #{score_forward.1} parent=1 // loop_header_branch
      %20 = sbr.rel (%p18) target = $region8
    $region5: #{score_forward.1} parent=1 // loop_body
      %s22 = ssub.s32 %s17, 1
      %s23 = ssub.s32 %s17, 2
      %s24 = sadd.s32 %s17, 1
      %s25 = ssub.s32 %s17, %s24
      %p26 = scmp.eq.s32.totalorder %s25, 0
      %s28 = sadd.s32 %s27, 1
      %s29 = scalar_select %p26, %s27, %s28
      %p32 = pneg %p26
      %p33 = scmp.eq.s32.totalorder %s17, 1
      %p34 = por %p32, %p33
      %p35 = scmp.ne.s32.totalorder %s27, %s30
      %p36 = scmp.eq.s32.totalorder %s17, 0
      %p37 = por %p35, %p36
      %p38 = scmp.ne.s32.totalorder %s27, %s30
      %p39 = scmp.eq.s32.totalorder %s22, 1
      %p40 = por %p38, %p39
      %p41 = scmp.ne.s32.totalorder %s30, %s31
      %p42 = scmp.eq.s32.totalorder %s22, 0
      %p43 = por %p41, %p42
      %p44 = scmp.ne.s32.totalorder %s30, %s31
      %p45 = scmp.eq.s32.totalorder %s23, 1
      %p46 = por %p44, %p45
      %p48 = scmp.ne.s32.totalorder %s31, %s47
      %p49 = scmp.eq.s32.totalorder %s23, 0
      %p50 = por %p48, %p49
      %s52 = sadd.s32 %s51, 1
      %p55 = scmp.eq.s32.totalorder %s17, 1
      %p56 = scmp.ne.s32.totalorder %s51, %s53
      %p57 = scmp.eq.s32.totalorder %s17, 0
      %p58 = por %p56, %p57
      %p59 = scmp.ne.s32.totalorder %s51, %s53
      %p60 = scmp.eq.s32.totalorder %s22, 1
      %p61 = por %p59, %p60
      %p62 = scmp.ne.s32.totalorder %s53, %s54
      %p63 = scmp.eq.s32.totalorder %s22, 0
      %p64 = por %p62, %p63
      %p65 = scmp.ne.s32.totalorder %s53, %s54
      %p66 = scmp.eq.s32.totalorder %s23, 1
      %p67 = por %p65, %p66
      %p69 = scmp.ne.s32.totalorder %s54, %s68
      %p70 = scmp.eq.s32.totalorder %s23, 0
      %p71 = por %p69, %p70
      %s73 = sadd.s32 %s72, 1
      %p76 = scmp.eq.s32.totalorder %s17, 1
      %p77 = scmp.ne.s32.totalorder %s72, %s74
      %p78 = scmp.eq.s32.totalorder %s17, 0
      %p79 = por %p77, %p78
      %p80 = scmp.ne.s32.totalorder %s72, %s74
      %p81 = scmp.eq.s32.totalorder %s22, 1
      %p82 = por %p80, %p81
      %p83 = scmp.ne.s32.totalorder %s74, %s75
      %p84 = scmp.eq.s32.totalorder %s22, 0
      %p85 = por %p83, %p84
      %p86 = scmp.ne.s32.totalorder %s74, %s75
      %p87 = scmp.eq.s32.totalorder %s23, 1
      %p88 = por %p86, %p87
      %p90 = scmp.ne.s32.totalorder %s75, %s89
      %p91 = scmp.eq.s32.totalorder %s23, 0
      %p92 = por %p90, %p91
      %s94 = sadd.s32 %s93, 1
      %p97 = scmp.eq.s32.totalorder %s17, 1
      %p98 = scmp.ne.s32.totalorder %s93, %s95
      %p99 = scmp.eq.s32.totalorder %s17, 0
      %p100 = por %p98, %p99
      %p101 = scmp.ne.s32.totalorder %s93, %s95
      %p102 = scmp.eq.s32.totalorder %s22, 1
      %p103 = por %p101, %p102
      %p104 = scmp.ne.s32.totalorder %s95, %s96
      %p105 = scmp.eq.s32.totalorder %s22, 0
      %p106 = por %p104, %p105
      %p107 = scmp.ne.s32.totalorder %s95, %s96
      %p108 = scmp.eq.s32.totalorder %s23, 1
      %p109 = por %p107, %p108
      %p111 = scmp.ne.s32.totalorder %s96, %s110
      %p112 = scmp.eq.s32.totalorder %s23, 0
      %p113 = por %p111, %p112
      %s115 = sadd.s32 %s114, 1
      %p118 = scmp.eq.s32.totalorder %s17, 1
      %p119 = scmp.ne.s32.totalorder %s114, %s116
      %p120 = scmp.eq.s32.totalorder %s17, 0
      %p121 = por %p119, %p120
      %p122 = scmp.ne.s32.totalorder %s114, %s116
      %p123 = scmp.eq.s32.totalorder %s22, 1
      %p124 = por %p122, %p123
      %p125 = scmp.ne.s32.totalorder %s116, %s117
      %p126 = scmp.eq.s32.totalorder %s22, 0
      %p127 = por %p125, %p126
      %p128 = scmp.ne.s32.totalorder %s116, %s117
      %p129 = scmp.eq.s32.totalorder %s23, 1
      %p130 = por %p128, %p129
      %p132 = scmp.ne.s32.totalorder %s117, %s131
      %p133 = scmp.eq.s32.totalorder %s23, 0
      %p134 = por %p132, %p133
      %s136 = sadd.s32 %s135, 1
      %p139 = scmp.eq.s32.totalorder %s17, 1
      %p140 = scmp.ne.s32.totalorder %s135, %s137
      %p141 = scmp.eq.s32.totalorder %s17, 0
      %p142 = por %p140, %p141
      %p143 = scmp.ne.s32.totalorder %s135, %s137
      %p144 = scmp.eq.s32.totalorder %s22, 1
      %p145 = por %p143, %p144
      %p146 = scmp.ne.s32.totalorder %s137, %s138
      %p147 = scmp.eq.s32.totalorder %s22, 0
      %p148 = por %p146, %p147
      %p149 = scmp.ne.s32.totalorder %s137, %s138
      %p150 = scmp.eq.s32.totalorder %s23, 1
      %p151 = por %p149, %p150
      %p153 = scmp.ne.s32.totalorder %s138, %s152
      %p154 = scmp.eq.s32.totalorder %s23, 0
      %p155 = por %p153, %p154
      %s157 = sadd.s32 %s156, 1
      %p160 = scmp.eq.s32.totalorder %s17, 1
      %p161 = scmp.ne.s32.totalorder %s156, %s158
      %p162 = scmp.eq.s32.totalorder %s17, 0
      %p163 = por %p161, %p162
      %p164 = scmp.ne.s32.totalorder %s156, %s158
      %p165 = scmp.eq.s32.totalorder %s22, 1
      %p166 = por %p164, %p165
      %p167 = scmp.ne.s32.totalorder %s158, %s159
      %p168 = scmp.eq.s32.totalorder %s22, 0
      %p169 = por %p167, %p168
      %p170 = scmp.ne.s32.totalorder %s158, %s159
      %p171 = scmp.eq.s32.totalorder %s23, 1
      %p172 = por %p170, %p171
      %p174 = scmp.ne.s32.totalorder %s159, %s173
      %p175 = scmp.eq.s32.totalorder %s23, 0
      %p176 = por %p174, %p175
      %s177 = ssub.s32 %s17, %s24
      %p178 = scmp.eq.s32.totalorder %s177, 0
      %s180 = sadd.s32 %s179, 1
      %s181 = scalar_select %p178, %s179, %s180
      %p184 = pneg %p178
      %p185 = scmp.eq.s32.totalorder %s17, 1
      %p186 = por %p184, %p185
      %p187 = scmp.ne.s32.totalorder %s179, %s182
      %p188 = scmp.eq.s32.totalorder %s17, 0
      %p189 = por %p187, %p188
      %p190 = scmp.ne.s32.totalorder %s179, %s182
      %p191 = scmp.eq.s32.totalorder %s22, 1
      %p192 = por %p190, %p191
      %p193 = scmp.ne.s32.totalorder %s182, %s183
      %p194 = scmp.eq.s32.totalorder %s22, 0
      %p195 = por %p193, %p194
      %p196 = scmp.ne.s32.totalorder %s182, %s183
      %p197 = scmp.eq.s32.totalorder %s23, 1
      %p198 = por %p196, %p197
      %p200 = scmp.ne.s32.totalorder %s183, %s199
      %p201 = scmp.eq.s32.totalorder %s23, 0
      %p202 = por %p200, %p201
      %p203 = scmp.le.s32.totalorder 1, %s17
      %p204 = scmp.lt.s32.totalorder %s17, 3
      %p205 = pnand %p203, %p204
      %p206 = pneg %p205
      // Predicated region
      $region9: #{score_forward.1} parent=5 // pred_check
        _
      $region10: #{score_forward.1} parent=5 // pred_check_branch
        %208 = sbr.rel (%p205) target = $region12
      $region11: #{score_forward.1} parent=5 // pred_region
        %s209 = ssub.s32 %s17, 1
        // Predicated region
        $region13: #{score_forward.1} parent=11 // pred_check
          %p210 = pneg %p64
        $region14: #{score_forward.1} parent=11 // pred_check_branch
          %212 = sbr.rel (%p210) target = $region16
        $region15: #{score_forward.1} parent=11 // pred_region
          _
        $region16: #{score_forward.1} parent=11 // pred_fallthru
          _
        // Predicated region
        $region17: #{score_forward.1} parent=11 // pred_check
          %p213 = pneg %p85
        $region18: #{score_forward.1} parent=11 // pred_check_branch
          %215 = sbr.rel (%p213) target = $region20
        $region19: #{score_forward.1} parent=11 // pred_region
          _
        $region20: #{score_forward.1} parent=11 // pred_fallthru
          _
        // Predicated region
        $region21: #{score_forward.1} parent=11 // pred_check
          %p216 = pneg %p106
        $region22: #{score_forward.1} parent=11 // pred_check_branch
          %218 = sbr.rel (%p216) target = $region24
        $region23: #{score_forward.1} parent=11 // pred_region
          _
        $region24: #{score_forward.1} parent=11 // pred_fallthru
          _
        // Predicated region
        $region25: #{score_forward.1} parent=11 // pred_check
          %p219 = pneg %p127
        $region26: #{score_forward.1} parent=11 // pred_check_branch
          %221 = sbr.rel (%p219) target = $region28
        $region27: #{score_forward.1} parent=11 // pred_region
          _
        $region28: #{score_forward.1} parent=11 // pred_fallthru
          _
        // Predicated region
        $region29: #{score_forward.1} parent=11 // pred_check
          %p222 = pneg %p148
        $region30: #{score_forward.1} parent=11 // pred_check_branch
          %224 = sbr.rel (%p222) target = $region32
        $region31: #{score_forward.1} parent=11 // pred_region
          _
        $region32: #{score_forward.1} parent=11 // pred_fallthru
          _
        // Predicated region
        $region33: #{score_forward.1} parent=11 // pred_check
          %p225 = pneg %p169
        $region34: #{score_forward.1} parent=11 // pred_check_branch
          %227 = sbr.rel (%p225) target = $region36
        $region35: #{score_forward.1} parent=11 // pred_region
          _
        $region36: #{score_forward.1} parent=11 // pred_fallthru
          _
      $region12: #{score_forward.1} parent=5 // pred_fallthru
        _
      %p228 = scmp.lt.s32.totalorder %s17, 2
      // Predicated region
      $region37: #{score_forward.1} parent=5 // pred_check
        %p229 = pneg %p228
      $region38: #{score_forward.1} parent=5 // pred_check_branch
        %231 = sbr.rel (%p229) target = $region40
      $region39: #{score_forward.1} parent=5 // pred_region
        // Predicated region
        $region41: #{score_forward.1} parent=39 // pred_check
          %p232 = pneg %p37
        $region42: #{score_forward.1} parent=39 // pred_check_branch
          %234 = sbr.rel (%p232) target = $region44
        $region43: #{score_forward.1} parent=39 // pred_region
          %s235 = smul.u32 32, %s17
          %p236 = scmp.lt.s32.totalorder %s235, 63
          %s237 = scalar_select %p236, %s235, 63
          %s238 = smul.addr %s237, 8
          %s239 = scalar_lea.vmem %s0, %s238
          %s240 = smul.u32 32, %s17
        $region44: #{score_forward.1} parent=39 // pred_fallthru
          _
      $region40: #{score_forward.1} parent=5 // pred_fallthru
        _
      %p241 = scmp.le.s32.totalorder 1, %s17
      %p242 = scmp.lt.s32.totalorder %s17, 3
      %p243 = pnand %p241, %p242
      %p244 = pneg %p243
      // Predicated region
      $region45: #{score_forward.1} parent=5 // pred_check
        _
      $region46: #{score_forward.1} parent=5 // pred_check_branch
        %246 = sbr.rel (%p243) target = $region48
      $region47: #{score_forward.1} parent=5 // pred_region
        %s247 = ssub.s32 %s17, 1
        %s248 = smul.u32 32, %s22
        %p249 = scmp.lt.s32.totalorder %s248, 63
        %s250 = scalar_select %p249, %s248, 63
        %s251 = smul.addr %s250, 8
        %s252 = scalar_lea.vmem %s0, %s251
        %p253 = pneg %p43
        %p254 = pneg %p40
        %p255 = pneg %p64
        %p256 = pneg %p61
        %p257 = pneg %p85
        %p258 = pneg %p82
        %p259 = pneg %p106
        %p260 = pneg %p103
        %p261 = pneg %p127
        %p262 = pneg %p124
        %p263 = pneg %p148
        %p264 = pneg %p145
        %p265 = pneg %p169
        %p266 = pneg %p166
        %p267 = pneg %p195
        %p268 = pneg %p192
        %s269 = sand.u32 %s182, 1
        %s270 = scalar_lea.sflag [#allocation4], %s269
        %s271 = sand.u32 %s182, 1
        %s272 = smul.addr %s271, 2
        %s273 = scalar_lea.vmem [#allocation3], %s272
        %s274 = smul.u32 32, %s22
        %p275 = scmp.lt.s32.totalorder %s274, 63
        %s276 = scalar_select %p275, %s274, 63
        %s277 = smul.addr %s276, 8
        %s278 = scalar_lea.vmem %s0, %s277
        %s279 = smul.u32 32, %s22
        %s280 = smul.u32 2, %s22
        %v282 = vld [vmem:[%s278] sm:$0xff]
        %v283 = vld [vmem:[%s278 + $0x8] sm:$0xff]
        %v284 = vld [vmem:[%s278 + $0x10] sm:$0xff]
        %v285 = vld [vmem:[%s278 + $0x18] sm:$0xff]
        %v286 = vld [vmem:[%s278 + $0x20] sm:$0xff]
        %v287 = vld [vmem:[%s278 + $0x28] sm:$0xff]
        %v288 = vld [vmem:[%s278 + $0x30] sm:$0xff]
        %v289 = vld [vmem:[%s278 + $0x38] sm:$0xff]
        %v290 = vld [vmem:[%s278 + $0x40] sm:$0xff]
        %v291 = vld [vmem:[%s278 + $0x48] sm:$0xff]
        %v292 = vld [vmem:[%s278 + $0x50] sm:$0xff]
        %v293 = vld [vmem:[%s278 + $0x58] sm:$0xff]
        %v294 = vld [vmem:[%s278 + $0x60] sm:$0xff]
        %v295 = vld [vmem:[%s278 + $0x68] sm:$0xff]
        %v296 = vld [vmem:[%s278 + $0x70] sm:$0xff]
        %v297 = vld [vmem:[%s278 + $0x78] sm:$0xff]
        %v298 = vld [vmem:[%s278 + $0x80] sm:$0xff]
        %v299 = vld [vmem:[%s278 + $0x88] sm:$0xff]
        %v300 = vld [vmem:[%s278 + $0x90] sm:$0xff]
        %v301 = vld [vmem:[%s278 + $0x98] sm:$0xff]
        %v302 = vld [vmem:[%s278 + $0xa0] sm:$0xff]
        %v303 = vld [vmem:[%s278 + $0xa8] sm:$0xff]
        %v304 = vld [vmem:[%s278 + $0xb0] sm:$0xff]
        %v305 = vld [vmem:[%s278 + $0xb8] sm:$0xff]
        %v306 = vld [vmem:[%s278 + $0xc0] sm:$0xff]
        %v307 = vld [vmem:[%s278 + $0xc8] sm:$0xff]
        %v308 = vld [vmem:[%s278 + $0xd0] sm:$0xff]
        %v309 = vld [vmem:[%s278 + $0xd8] sm:$0xff]
        %v310 = vld [vmem:[%s278 + $0xe0] sm:$0xff]
        %v311 = vld [vmem:[%s278 + $0xe8] sm:$0xff]
        %v312 = vld [vmem:[%s278 + $0xf0] sm:$0xff]
        %v313 = vld [vmem:[%s278 + $0xf8] sm:$0xff]
        %v314 = vpack.c.bf16 %v283, %v282
        %v315 = vpack.c.bf16 %v285, %v284
        %v316 = vpack.c.bf16 %v287, %v286
        %v317 = vpack.c.bf16 %v289, %v288
        %v318 = vpack.c.bf16 %v291, %v290
        %v319 = vpack.c.bf16 %v293, %v292
        %v320 = vpack.c.bf16 %v295, %v294
        %v321 = vpack.c.bf16 %v297, %v296
        %v322 = vpack.c.bf16 %v299, %v298
        %v323 = vpack.c.bf16 %v301, %v300
        %v324 = vpack.c.bf16 %v303, %v302
        %v325 = vpack.c.bf16 %v305, %v304
        %v326 = vpack.c.bf16 %v307, %v306
        %v327 = vpack.c.bf16 %v309, %v308
        %v328 = vpack.c.bf16 %v311, %v310
        %v329 = vpack.c.bf16 %v313, %v312
        %v330 = vld [vmem:[%s1] sm:$0xf]
        %v331 = vld [vmem:[%s1 + $0x4] sm:$0xf]
        %v332 = vld [vmem:[%s1 + $0x8] sm:$0xf]
        %v333 = vld [vmem:[%s1 + $0xc] sm:$0xf]
        %v334 = vld [vmem:[%s2] sm:$0x1]
        %v336 = vperm.slane %v334, 0
        %v342 = vunpack.c.l.b16 %v330
        %v343 = vunpack.c.l.b16 %v331
        %v344 = vunpack.c.l.b16 %v332
        %v345 = vunpack.c.l.b16 %v333
        %v346 = vpack.c.b16 %v343, %v342
        %v347 = vpack.c.b16 %v345, %v344
        %vm350 = vcmask 261120
        %v352 = vsel %vm350, %v314, 0
        %v355 = vsel %vm350, %v315, 0
        %v358 = vsel %vm350, %v316, 0
        %v361 = vsel %vm350, %v317, 0
        %v364 = vsel %vm350, %v318, 0
        %v367 = vsel %vm350, %v319, 0
        %v370 = vsel %vm350, %v320, 0
        %v373 = vsel %vm350, %v321, 0
        %v376 = vsel %vm350, %v322, 0
        %v379 = vsel %vm350, %v323, 0
        %v382 = vsel %vm350, %v324, 0
        %v385 = vsel %vm350, %v325, 0
        %v388 = vsel %vm350, %v326, 0
        %v391 = vsel %vm350, %v327, 0
        %v394 = vsel %vm350, %v328, 0
        %v397 = vsel %vm350, %v329, 0
        %399 = vmatpush.bf16.msra.mxu0 0
        %400 = vmatpush.bf16.msra.mxu0 0
        %401 = vmatpush.bf16.msra.mxu0 0
        %402 = vmatpush.bf16.msra.mxu0 0
        %403 = vmatpush.bf16.msra.mxu0 0
        %404 = vmatpush.bf16.msra.mxu0 0
        %405 = vmatpush.bf16.msra.mxu0 %v347
        %406 = vmatpush.bf16.msra.mxu0 %v346
        %407 = vmatmul.bf16.gmra.mxu0 %v352
        %v408 = vpop.f32.mrf.mxu0
        %v409 = vadd.f32 %v336, %v408
        %v410 = vpop.f32.mrf.mxu0
        %v411 = vadd.f32 %v336, %v410
        %412 = vmatmul.bf16.gmra.mxu0 %v355
        %v413 = vpop.f32.mrf.mxu0
        %v414 = vadd.f32 %v336, %v413
        %v415 = vpop.f32.mrf.mxu0
        %v416 = vadd.f32 %v336, %v415
        %417 = vmatmul.bf16.gmra.mxu0 %v358
        %v418 = vpop.f32.mrf.mxu0
        %v419 = vadd.f32 %v336, %v418
        %v420 = vpop.f32.mrf.mxu0
        %v421 = vadd.f32 %v336, %v420
        %422 = vmatmul.bf16.gmra.mxu0 %v361
        %v423 = vpop.f32.mrf.mxu0
        %v424 = vadd.f32 %v336, %v423
        %v425 = vpop.f32.mrf.mxu0
        %v426 = vadd.f32 %v336, %v425
        %427 = vmatmul.bf16.gmra.mxu0 %v364
        %v428 = vpop.f32.mrf.mxu0
        %v429 = vadd.f32 %v336, %v428
        %v430 = vpop.f32.mrf.mxu0
        %v431 = vadd.f32 %v336, %v430
        %432 = vmatmul.bf16.gmra.mxu0 %v367
        %v433 = vpop.f32.mrf.mxu0
        %v434 = vadd.f32 %v336, %v433
        %v435 = vpop.f32.mrf.mxu0
        %v436 = vadd.f32 %v336, %v435
        %437 = vmatmul.bf16.gmra.mxu0 %v370
        %v438 = vpop.f32.mrf.mxu0
        %v439 = vadd.f32 %v336, %v438
        %v440 = vpop.f32.mrf.mxu0
        %v441 = vadd.f32 %v336, %v440
        %442 = vmatmul.bf16.gmra.mxu0 %v373
        %v443 = vpop.f32.mrf.mxu0
        %v444 = vadd.f32 %v336, %v443
        %v445 = vpop.f32.mrf.mxu0
        %v446 = vadd.f32 %v336, %v445
        %447 = vmatmul.bf16.gmra.mxu0 %v376
        %v448 = vpop.f32.mrf.mxu0
        %v449 = vadd.f32 %v336, %v448
        %v450 = vpop.f32.mrf.mxu0
        %v451 = vadd.f32 %v336, %v450
        %452 = vmatmul.bf16.gmra.mxu0 %v379
        %v453 = vpop.f32.mrf.mxu0
        %v454 = vadd.f32 %v336, %v453
        %v455 = vpop.f32.mrf.mxu0
        %v456 = vadd.f32 %v336, %v455
        %457 = vmatmul.bf16.gmra.mxu0 %v382
        %v458 = vpop.f32.mrf.mxu0
        %v459 = vadd.f32 %v336, %v458
        %v460 = vpop.f32.mrf.mxu0
        %v461 = vadd.f32 %v336, %v460
        %462 = vmatmul.bf16.gmra.mxu0 %v385
        %v463 = vpop.f32.mrf.mxu0
        %v464 = vadd.f32 %v336, %v463
        %v465 = vpop.f32.mrf.mxu0
        %v466 = vadd.f32 %v336, %v465
        %467 = vmatmul.bf16.gmra.mxu0 %v388
        %v468 = vpop.f32.mrf.mxu0
        %v469 = vadd.f32 %v336, %v468
        %v470 = vpop.f32.mrf.mxu0
        %v471 = vadd.f32 %v336, %v470
        %472 = vmatmul.bf16.gmra.mxu0 %v391
        %v473 = vpop.f32.mrf.mxu0
        %v474 = vadd.f32 %v336, %v473
        %v475 = vpop.f32.mrf.mxu0
        %v476 = vadd.f32 %v336, %v475
        %477 = vmatmul.bf16.gmra.mxu0 %v394
        %v478 = vpop.f32.mrf.mxu0
        %v479 = vadd.f32 %v336, %v478
        %v480 = vpop.f32.mrf.mxu0
        %v481 = vadd.f32 %v336, %v480
        %482 = vmatmul.bf16.gmra.mxu0 %v397
        %v483 = vpop.f32.mrf.mxu0
        %v484 = vadd.f32 %v336, %v483
        %v485 = vpop.f32.mrf.mxu0
        %v486 = vadd.f32 %v336, %v485
        %487 = vdwg.mxu0
        %v488 = vmax.f32 %v409, 0.0
        %v489 = vmax.f32 %v411, 0.0
        %v490 = vmax.f32 %v414, 0.0
        %v491 = vmax.f32 %v416, 0.0
        %v492 = vmax.f32 %v419, 0.0
        %v493 = vmax.f32 %v421, 0.0
        %v494 = vmax.f32 %v424, 0.0
        %v495 = vmax.f32 %v426, 0.0
        %v496 = vmax.f32 %v429, 0.0
        %v497 = vmax.f32 %v431, 0.0
        %v498 = vmax.f32 %v434, 0.0
        %v499 = vmax.f32 %v436, 0.0
        %v500 = vmax.f32 %v439, 0.0
        %v501 = vmax.f32 %v441, 0.0
        %v502 = vmax.f32 %v444, 0.0
        %v503 = vmax.f32 %v446, 0.0
        %v504 = vmax.f32 %v449, 0.0
        %v505 = vmax.f32 %v451, 0.0
        %v506 = vmax.f32 %v454, 0.0
        %v507 = vmax.f32 %v456, 0.0
        %v508 = vmax.f32 %v459, 0.0
        %v509 = vmax.f32 %v461, 0.0
        %v510 = vmax.f32 %v464, 0.0
        %v511 = vmax.f32 %v466, 0.0
        %v512 = vmax.f32 %v469, 0.0
        %v513 = vmax.f32 %v471, 0.0
        %v514 = vmax.f32 %v474, 0.0
        %v515 = vmax.f32 %v476, 0.0
        %v516 = vmax.f32 %v479, 0.0
        %v517 = vmax.f32 %v481, 0.0
        %v518 = vmax.f32 %v484, 0.0
        %v519 = vmax.f32 %v486, 0.0
        %v520 = vpack.c.bf16 %v489, %v488
        %v521 = vpack.c.bf16 %v491, %v490
        %v522 = vpack.c.bf16 %v493, %v492
        %v523 = vpack.c.bf16 %v495, %v494
        %v524 = vpack.c.bf16 %v497, %v496
        %v525 = vpack.c.bf16 %v499, %v498
        %v526 = vpack.c.bf16 %v501, %v500
        %v527 = vpack.c.bf16 %v503, %v502
        %v528 = vpack.c.bf16 %v505, %v504
        %v529 = vpack.c.bf16 %v507, %v506
        %v530 = vpack.c.bf16 %v509, %v508
        %v531 = vpack.c.bf16 %v511, %v510
        %v532 = vpack.c.bf16 %v513, %v512
        %v533 = vpack.c.bf16 %v515, %v514
        %v534 = vpack.c.bf16 %v517, %v516
        %v535 = vpack.c.bf16 %v519, %v518
        %v536 = vld [vmem:[%s3] sm:$0xf]
        %v537 = vld [vmem:[%s3 + $0x4] sm:$0xf]
        %v538 = vld [vmem:[%s3 + $0x8] sm:$0xf]
        %v539 = vld [vmem:[%s3 + $0xc] sm:$0xf]
        %v540 = vld [vmem:[%s4] sm:$0x1]
        %v542 = vperm.slane %v540, 0
        %v548 = vunpack.c.l.b16 %v536
        %v549 = vunpack.c.l.b16 %v537
        %v550 = vunpack.c.l.b16 %v538
        %v551 = vunpack.c.l.b16 %v539
        %v552 = vpack.c.b16 %v549, %v548
        %v553 = vpack.c.b16 %v551, %v550
        %v557 = vsel %vm350, %v520, 0
        %v560 = vsel %vm350, %v521, 0
        %v563 = vsel %vm350, %v522, 0
        %v566 = vsel %vm350, %v523, 0
        %v569 = vsel %vm350, %v524, 0
        %v572 = vsel %vm350, %v525, 0
        %v575 = vsel %vm350, %v526, 0
        %v578 = vsel %vm350, %v527, 0
        %v581 = vsel %vm350, %v528, 0
        %v584 = vsel %vm350, %v529, 0
        %v587 = vsel %vm350, %v530, 0
        %v590 = vsel %vm350, %v531, 0
        %v593 = vsel %vm350, %v532, 0
        %v596 = vsel %vm350, %v533, 0
        %v599 = vsel %vm350, %v534, 0
        %v602 = vsel %vm350, %v535, 0
        %604 = vmatpush.bf16.msra.mxu0 0
        %605 = vmatpush.bf16.msra.mxu0 0
        %606 = vmatpush.bf16.msra.mxu0 0
        %607 = vmatpush.bf16.msra.mxu0 0
        %608 = vmatpush.bf16.msra.mxu0 0
        %609 = vmatpush.bf16.msra.mxu0 0
        %610 = vmatpush.bf16.msra.mxu0 %v553
        %611 = vmatpush.bf16.msra.mxu0 %v552
        %612 = vmatmul.bf16.gmra.mxu0 %v557
        %v613 = vpop.f32.mrf.mxu0
        %v614 = vadd.f32 %v542, %v613
        %v615 = vpop.f32.mrf.mxu0
        %v616 = vadd.f32 %v542, %v615
        %617 = vmatmul.bf16.gmra.mxu0 %v560
        %v618 = vpop.f32.mrf.mxu0
        %v619 = vadd.f32 %v542, %v618
        %v620 = vpop.f32.mrf.mxu0
        %v621 = vadd.f32 %v542, %v620
        %622 = vmatmul.bf16.gmra.mxu0 %v563
        %v623 = vpop.f32.mrf.mxu0
        %v624 = vadd.f32 %v542, %v623
        %v625 = vpop.f32.mrf.mxu0
        %v626 = vadd.f32 %v542, %v625
        %627 = vmatmul.bf16.gmra.mxu0 %v566
        %v628 = vpop.f32.mrf.mxu0
        %v629 = vadd.f32 %v542, %v628
        %v630 = vpop.f32.mrf.mxu0
        %v631 = vadd.f32 %v542, %v630
        %632 = vmatmul.bf16.gmra.mxu0 %v569
        %v633 = vpop.f32.mrf.mxu0
        %v634 = vadd.f32 %v542, %v633
        %v635 = vpop.f32.mrf.mxu0
        %v636 = vadd.f32 %v542, %v635
        %637 = vmatmul.bf16.gmra.mxu0 %v572
        %v638 = vpop.f32.mrf.mxu0
        %v639 = vadd.f32 %v542, %v638
        %v640 = vpop.f32.mrf.mxu0
        %v641 = vadd.f32 %v542, %v640
        %642 = vmatmul.bf16.gmra.mxu0 %v575
        %v643 = vpop.f32.mrf.mxu0
        %v644 = vadd.f32 %v542, %v643
        %v645 = vpop.f32.mrf.mxu0
        %v646 = vadd.f32 %v542, %v645
        %647 = vmatmul.bf16.gmra.mxu0 %v578
        %v648 = vpop.f32.mrf.mxu0
        %v649 = vadd.f32 %v542, %v648
        %v650 = vpop.f32.mrf.mxu0
        %v651 = vadd.f32 %v542, %v650
        %652 = vmatmul.bf16.gmra.mxu0 %v581
        %v653 = vpop.f32.mrf.mxu0
        %v654 = vadd.f32 %v542, %v653
        %v655 = vpop.f32.mrf.mxu0
        %v656 = vadd.f32 %v542, %v655
        %657 = vmatmul.bf16.gmra.mxu0 %v584
        %v658 = vpop.f32.mrf.mxu0
        %v659 = vadd.f32 %v542, %v658
        %v660 = vpop.f32.mrf.mxu0
        %v661 = vadd.f32 %v542, %v660
        %662 = vmatmul.bf16.gmra.mxu0 %v587
        %v663 = vpop.f32.mrf.mxu0
        %v664 = vadd.f32 %v542, %v663
        %v665 = vpop.f32.mrf.mxu0
        %v666 = vadd.f32 %v542, %v665
        %667 = vmatmul.bf16.gmra.mxu0 %v590
        %v668 = vpop.f32.mrf.mxu0
        %v669 = vadd.f32 %v542, %v668
        %v670 = vpop.f32.mrf.mxu0
        %v671 = vadd.f32 %v542, %v670
        %672 = vmatmul.bf16.gmra.mxu0 %v593
        %v673 = vpop.f32.mrf.mxu0
        %v674 = vadd.f32 %v542, %v673
        %v675 = vpop.f32.mrf.mxu0
        %v676 = vadd.f32 %v542, %v675
        %677 = vmatmul.bf16.gmra.mxu0 %v596
        %v678 = vpop.f32.mrf.mxu0
        %v679 = vadd.f32 %v542, %v678
        %v680 = vpop.f32.mrf.mxu0
        %v681 = vadd.f32 %v542, %v680
        %682 = vmatmul.bf16.gmra.mxu0 %v599
        %v683 = vpop.f32.mrf.mxu0
        %v684 = vadd.f32 %v542, %v683
        %v685 = vpop.f32.mrf.mxu0
        %v686 = vadd.f32 %v542, %v685
        %687 = vmatmul.bf16.gmra.mxu0 %v602
        %v688 = vpop.f32.mrf.mxu0
        %v689 = vadd.f32 %v542, %v688
        %v690 = vpop.f32.mrf.mxu0
        %v691 = vadd.f32 %v542, %v690
        %692 = vdwg.mxu0
        %v693 = vmax.f32 %v614, 0.0
        %v694 = vmax.f32 %v616, 0.0
        %v695 = vmax.f32 %v619, 0.0
        %v696 = vmax.f32 %v621, 0.0
        %v697 = vmax.f32 %v624, 0.0
        %v698 = vmax.f32 %v626, 0.0
        %v699 = vmax.f32 %v629, 0.0
        %v700 = vmax.f32 %v631, 0.0
        %v701 = vmax.f32 %v634, 0.0
        %v702 = vmax.f32 %v636, 0.0
        %v703 = vmax.f32 %v639, 0.0
        %v704 = vmax.f32 %v641, 0.0
        %v705 = vmax.f32 %v644, 0.0
        %v706 = vmax.f32 %v646, 0.0
        %v707 = vmax.f32 %v649, 0.0
        %v708 = vmax.f32 %v651, 0.0
        %v709 = vmax.f32 %v654, 0.0
        %v710 = vmax.f32 %v656, 0.0
        %v711 = vmax.f32 %v659, 0.0
        %v712 = vmax.f32 %v661, 0.0
        %v713 = vmax.f32 %v664, 0.0
        %v714 = vmax.f32 %v666, 0.0
        %v715 = vmax.f32 %v669, 0.0
        %v716 = vmax.f32 %v671, 0.0
        %v717 = vmax.f32 %v674, 0.0
        %v718 = vmax.f32 %v676, 0.0
        %v719 = vmax.f32 %v679, 0.0
        %v720 = vmax.f32 %v681, 0.0
        %v721 = vmax.f32 %v684, 0.0
        %v722 = vmax.f32 %v686, 0.0
        %v723 = vmax.f32 %v689, 0.0
        %v724 = vmax.f32 %v691, 0.0
        %v725 = vld [vmem:[%s5] sm:$0x1]
        %v726 = vpack.c.bf16 %v694, %v693
        %v727 = vpack.c.bf16 %v696, %v695
        %v728 = vpack.c.bf16 %v698, %v697
        %v729 = vpack.c.bf16 %v700, %v699
        %v730 = vpack.c.bf16 %v702, %v701
        %v731 = vpack.c.bf16 %v704, %v703
        %v732 = vpack.c.bf16 %v706, %v705
        %v733 = vpack.c.bf16 %v708, %v707
        %v734 = vpack.c.bf16 %v710, %v709
        %v735 = vpack.c.bf16 %v712, %v711
        %v736 = vpack.c.bf16 %v714, %v713
        %v737 = vpack.c.bf16 %v716, %v715
        %v738 = vpack.c.bf16 %v718, %v717
        %v739 = vpack.c.bf16 %v720, %v719
        %v740 = vpack.c.bf16 %v722, %v721
        %v741 = vpack.c.bf16 %v724, %v723
        %s742 = sld [smem:[#allocation2]]
        %v743 = vstv %s742
        %v745 = vsel %vm350, %v725, 0
        %v748 = vsel %vm350, %v726, 0
        %v751 = vsel %vm350, %v727, 0
        %v754 = vsel %vm350, %v728, 0
        %v757 = vsel %vm350, %v729, 0
        %v760 = vsel %vm350, %v730, 0
        %v763 = vsel %vm350, %v731, 0
        %v766 = vsel %vm350, %v732, 0
        %v769 = vsel %vm350, %v733, 0
        %v772 = vsel %vm350, %v734, 0
        %v775 = vsel %vm350, %v735, 0
        %v778 = vsel %vm350, %v736, 0
        %v781 = vsel %vm350, %v737, 0
        %v784 = vsel %vm350, %v738, 0
        %v787 = vsel %vm350, %v739, 0
        %v790 = vsel %vm350, %v740, 0
        %v793 = vsel %vm350, %v741, 0
        %795 = vmatpush.bf16.xpose.msra.mxu0 %v769
        %796 = vmatpush.bf16.xpose.msra.mxu0 %v766
        %797 = vmatpush.bf16.xpose.msra.mxu0 %v763
        %798 = vmatpush.bf16.xpose.msra.mxu0 %v760
        %799 = vmatpush.bf16.xpose.msra.mxu0 %v757
        %800 = vmatpush.bf16.xpose.msra.mxu0 %v754
        %801 = vmatpush.bf16.xpose.msra.mxu0 %v751
        %802 = vmatpush.bf16.xpose.msra.mxu0 %v748
        %803 = vmatmul.bf16.gmra.mxu0 %v745
        %v804 = vpop.f32.mrf.mxu0
        %v805 = vadd.f32 %v743, %v804
        %v806 = vpop.f32.mrf.mxu0
        %807 = vdwg.mxu0
        %808 = vmatpush.bf16.xpose.msra.mxu0 %v793
        %809 = vmatpush.bf16.xpose.msra.mxu0 %v790
        %810 = vmatpush.bf16.xpose.msra.mxu0 %v787
        %811 = vmatpush.bf16.xpose.msra.mxu0 %v784
        %812 = vmatpush.bf16.xpose.msra.mxu0 %v781
        %813 = vmatpush.bf16.xpose.msra.mxu0 %v778
        %814 = vmatpush.bf16.xpose.msra.mxu0 %v775
        %815 = vmatpush.bf16.xpose.msra.mxu0 %v772
        %816 = vmatmul.bf16.gmra.mxu0 %v745
        %v817 = vpop.f32.mrf.mxu0
        %v818 = vadd.f32 %v743, %v817
        %v819 = vpop.f32.mrf.mxu0
        %820 = vdwg.mxu0
        %v823 = vrot.slane %v818, 7
        %vm824 = vcmask 1040384
        %v825 = vsel %vm824, %v805, %v823
        %v827 = vlaneseq
        %vm828 = vcmp.ge.s32.totalorder %v827, 0
        %vm829 = vcmp.lt.s32.totalorder %v827, 256
        %vm830 = vmand %vm828, %vm829
        %831 = vst.msk [vmem:[%s273] sm:$0x3] %vm830, %v825
        %s832 = sand.u32 %s182, 1
        %s833 = scalar_lea.sflag [#allocation4], %s832
        %s834 = sand.u32 %s182, 1
        %s835 = smul.addr %s834, 2
        %s836 = scalar_lea.vmem [#allocation3], %s835
        // Predicated region
        $region49: #{score_forward.1} parent=47 // pred_check
          %p837 = pneg %p192
        $region50: #{score_forward.1} parent=47 // pred_check_branch
          %839 = sbr.rel (%p837) target = $region52
        $region51: #{score_forward.1} parent=47 // pred_region
          %s840 = smul.u32 2, %s22
          %842 = vsyncadd %s833, 0
          %s843 = scalar_lea.hbm %s7, %s840
          %s845 = sshll.u32 %s836, 4
          %s846 = int_to_ptr.vmem [resolvable:$true] %s845
          %s847 = sshll.u32 %s843, 4
          %s848 = int_to_ptr.hbm [resolvable:$true] %s847
          %850 = dma.vmem_to_hbm [thread:$0]  %s846, 32, %s848, %s833
        $region52: #{score_forward.1} parent=47 // pred_fallthru
          _
      $region48: #{score_forward.1} parent=5 // pred_fallthru
        _
      %p851 = scmp.le.s32.totalorder 2, %s17
      // Predicated region
      $region53: #{score_forward.1} parent=5 // pred_check
        %p852 = pneg %p851
      $region54: #{score_forward.1} parent=5 // pred_check_branch
        %854 = sbr.rel (%p852) target = $region56
      $region55: #{score_forward.1} parent=5 // pred_region
        %s855 = ssub.s32 %s17, 2
        // Predicated region
        $region57: #{score_forward.1} parent=55 // pred_check
          %p856 = pneg %p198
        $region58: #{score_forward.1} parent=55 // pred_check_branch
          %858 = sbr.rel (%p856) target = $region60
        $region59: #{score_forward.1} parent=55 // pred_region
          %s859 = sand.u32 %s183, 1
          %s860 = scalar_lea.sflag [#allocation4], %s859
          %s861 = sand.u32 %s183, 1
          %s862 = smul.addr %s861, 2
          %s863 = scalar_lea.vmem [#allocation3], %s862
          %865 = dma.done %s860, 32
        $region60: #{score_forward.1} parent=55 // pred_fallthru
          _
      $region56: #{score_forward.1} parent=5 // pred_fallthru
        _
    $region6: #{score_forward.1} parent=1 // loop_footer
      %s21 = sadd.s32 1, %s17
    $region7: #{score_forward.1} parent=1 // loop_footer_branch
      %16 = sbr.rel target = $region3
    $region8: #{score_forward.1} parent=1 // loop_exit
      _
    %866 = vsyncpa [#allocation4], 1
    %s867 = scalar_lea.sflag [#allocation4], 1
    %868 = vsyncpa %s867, 1

</llo_original>
